<compile_context>
chip_gen: v5e
topology: v5e:2x2
jax: 0.10.0
libtpu: 0.0.40
codegen_flags: <defaults>
</compile_context>

<pallas_src>
import functools

import jax
import jax.numpy as jnp
from jax.experimental import pallas as pl
from jax.experimental.pallas import tpu as pltpu


def _round_up(x, m):
    return ((x + m - 1) // m) * m


def _vmem_limit_bytes():
    # Generation-aware scoped-VMEM limit: ~75% of physical VMEM (96 MiB on the
    # 128 MiB v5e/v6e, 48 MiB on the 64 MiB v7x).  Falls back to a safe 48 MiB.
    try:
        cap = pltpu.get_tpu_info().vmem_capacity_bytes
    except Exception:
        cap = 64 * 1024 * 1024
    return int(min(100 * 1024 * 1024, (cap * 3) // 4))


# ---------------------------------------------------------------------------
# Kernel 1a (FOLD path): single K=9*C_in MXU dot + BN partial stats per row block
# ---------------------------------------------------------------------------
def _conv_stats_fold_kernel(x_ref, w_ref, y_ref, psum_ref, pssq_ref):
    # x_ref : (1, tm, 9*C_in)          compute dtype (im2col patches; zero row padding)
    # w_ref : (9*C_in, C_out_pad)      compute dtype
    # y_ref : (1, tm, C_out_pad)       compute dtype
    # psum/pssq : (1, 1, 8, C_out_pad) f32 (8 sublanes to satisfy the (8,128) block rule)
    acc = jnp.dot(x_ref[0], w_ref[...], preferred_element_type=jnp.float32)
    y_ref[0] = acc.astype(y_ref.dtype)
    # Zero-padded rows contribute 0 to both sums, so no mask is needed here.
    sums = jnp.sum(acc, axis=0, keepdims=True)          # (1, C_out_pad)
    ssqs = jnp.sum(acc * acc, axis=0, keepdims=True)
    psum_ref[0, 0] = jnp.broadcast_to(sums, psum_ref.shape[2:])
    pssq_ref[0, 0] = jnp.broadcast_to(ssqs, pssq_ref.shape[2:])


# ---------------------------------------------------------------------------
# Kernel 1b (SHIFT path): 9 shifted taps, local f32 accumulation, in-kernel iota mask
# ---------------------------------------------------------------------------
def _conv_stats_shift_kernel(x_ref, w_ref, y_ref, psum_ref, pssq_ref, *,
                             tap_phase, tap_off, m_img, w_out, wph):
    # x_ref : (s*s, 1, L, C_in)   compute dtype (phase-split flattened padded image)
    # w_ref : (9, C_in, tc)       compute dtype (one C_out channel block)
    # y_ref : (1, m_img, tc)      compute dtype
    # psum/pssq : (1, 8, tc)      f32
    acc = None
    for t in range(9):
        xt = x_ref[tap_phase[t], 0, pl.ds(tap_off[t], m_img), :]     # (m_img, C_in)
        contrib = jnp.dot(xt, w_ref[t], preferred_element_type=jnp.float32)
        acc = contrib if acc is None else acc + contrib               # local f32 acc
    y_ref[0] = acc.astype(y_ref.dtype)                                # single y write

    # Validity mask for wrap-around junk columns, generated in-kernel.
    col = jax.lax.broadcasted_iota(jnp.int32, (m_img, 1), 0) % wph
    ym = jnp.where(col < w_out, acc, 0.0)                             # masked tile (reused)
    sums = jnp.sum(ym, axis=0, keepdims=True)
    ssqs = jnp.sum(ym * acc, axis=0, keepdims=True)                   # mask is 0/1
    psum_ref[0] = jnp.broadcast_to(sums, psum_ref.shape[1:])
    pssq_ref[0] = jnp.broadcast_to(ssqs, pssq_ref.shape[1:])


# ---------------------------------------------------------------------------
# Kernel 2: apply batch-norm (per-channel scale/shift) + LeakyReLU
# ---------------------------------------------------------------------------
def _bn_lrelu_kernel(y_ref, scale_ref, shift_ref, o_ref, *, negative_slope):
    z = y_ref[...].astype(jnp.float32) * scale_ref[...] + shift_ref[...]
    o_ref[...] = jnp.where(z >= 0, z, negative_slope * z).astype(o_ref.dtype)


# ---------------------------------------------------------------------------
# Wrapper
# ---------------------------------------------------------------------------
def _block_forward(x_nchw, conv_w, conv_b, gamma, beta, *, stride, eps=1e-5,
                   negative_slope=0.2, compute_dtype=jnp.bfloat16, fold_taps=None):
    """Conv(3x3, pad=1, stride) -> BatchNorm2d(training) -> LeakyReLU(0.2).

    x_nchw : (N, C_in, H, W) f32, conv_w : (C_out, C_in, 3, 3), conv_b : (C_out,)
    gamma, beta : (C_out,). Returns (N, C_out, H_out, W_out) f32.
    """
    # The conv bias is exactly cancelled by training-mode BN mean subtraction.
    del conv_b

    N, C_in, H, W = x_nchw.shape
    C_out = conv_w.shape[0]
    s = int(stride)
    H_out = (H + 2 - 3) // s + 1
    W_out = (W + 2 - 3) // s + 1
    C_out_pad = _round_up(C_out, 128)            # lane-dense channels
    if fold_taps is None:
        # Fold only when K=C_in badly under-fills the MXU contraction; large-C_in
        # layers keep the no-blowup flatten-and-shift path (K already >= 64-256).
        fold_taps = (9 * C_in) <= 288

    vmem_limit = _vmem_limit_bytes()

    # ---- glue: NCHW -> NHWC, cast to compute dtype FIRST, zero pad=1 ----
    x = jnp.transpose(x_nchw, (0, 2, 3, 1)).astype(compute_dtype)
    xp = jnp.pad(x, ((0, 0), (1, 1), (1, 1), (0, 0)))                 # (N, H+2, W+2, C_in)

    if fold_taps:
        # ------------------- FOLD path: K = 9*C_in, row-blocked -------------------
        K9 = 9 * C_in
        m = H_out * W_out
        tm = 2048 if m > 2048 else _round_up(m, 8)
        m_pad = _round_up(m, tm)
        n_rb = m_pad // tm

        cols = []
        for dh in range(3):
            for dw in range(3):
                cols.append(xp[:, dh:dh + s * (H_out - 1) + 1:s,
                               dw:dw + s * (W_out - 1) + 1:s, :])     # (N,H_out,W_out,C_in)
        xcol = jnp.concatenate(cols, axis=-1).reshape(N, m, K9)
        xcol = jnp.pad(xcol, ((0, 0), (0, m_pad - m), (0, 0)))        # zero rows -> 0 stats

        w9 = jnp.transpose(conv_w.astype(jnp.float32), (2, 3, 1, 0)).reshape(K9, C_out)
        w9 = jnp.pad(w9, ((0, 0), (0, C_out_pad - C_out))).astype(compute_dtype)

        y, psum, pssq = pl.pallas_call(
            _conv_stats_fold_kernel,
            out_shape=(
                jax.ShapeDtypeStruct((N, m_pad, C_out_pad), compute_dtype),
                jax.ShapeDtypeStruct((N, n_rb, 8, C_out_pad), jnp.float32),
                jax.ShapeDtypeStruct((N, n_rb, 8, C_out_pad), jnp.float32),
            ),
            grid_spec=pltpu.PrefetchScalarGridSpec(
                num_scalar_prefetch=0,
                grid=(N, n_rb),
                in_specs=[
                    pl.BlockSpec((1, tm, K9), lambda n, r: (n, r, 0)),
                    pl.BlockSpec((K9, C_out_pad), lambda n, r: (0, 0)),
                ],
                out_specs=[
                    pl.BlockSpec((1, tm, C_out_pad), lambda n, r: (n, r, 0)),
                    pl.BlockSpec((1, 1, 8, C_out_pad), lambda n, r: (n, r, 0, 0)),
                    pl.BlockSpec((1, 1, 8, C_out_pad), lambda n, r: (n, r, 0, 0)),
                ],
            ),
            compiler_params=pltpu.CompilerParams(
                dimension_semantics=("parallel", "parallel"),
                vmem_limit_bytes=vmem_limit),
        )(xcol, w9)
        csum = jnp.sum(psum[:, :, 0, :], axis=(0, 1))                 # (C_out_pad,)
        cssq = jnp.sum(pssq[:, :, 0, :], axis=(0, 1))
        m_rows = m_pad
    else:
        # ------------- SHIFT path: flatten-and-shift, C_out channel blocks -------------
        halo = 2 // s
        Hph = H_out + halo
        Wph = W_out + halo
        m_img = H_out * Wph
        max_off = halo * Wph + halo
        L = m_img + max_off
        Hp, Wp = H + 2, W + 2
        pad_h = max(0, (s - 1) + s * (Hph - 1) + 1 - Hp)
        pad_w = max(0, (s - 1) + s * (Wph - 1) + 1 - Wp)
        xpp = jnp.pad(xp, ((0, 0), (0, pad_h), (0, pad_w), (0, 0)))
        if s == 1:
            # Phase split is an identity reshape at stride 1 -> skip the stack copy.
            xph = xpp.reshape(1, N, Hph * Wph, C_in)
        else:
            phases = []
            for a in range(s):
                for b in range(s):
                    phases.append(xpp[:, a::s, b::s, :][:, :Hph, :Wph, :])
            xph = jnp.stack(phases, axis=0).reshape(s * s, N, Hph * Wph, C_in)
        xph = jnp.pad(xph, ((0, 0), (0, 0), (0, L - Hph * Wph), (0, 0)))

        w_taps = jnp.transpose(conv_w.astype(jnp.float32), (2, 3, 1, 0)).reshape(9, C_in, C_out)
        w_taps = jnp.pad(w_taps, ((0, 0), (0, 0), (0, C_out_pad - C_out))).astype(compute_dtype)

        tap_phase, tap_off = [], []
        for dh in range(3):
            for dw in range(3):
                tap_phase.append((dh % s) * s + (dw % s))
                tap_off.append((dh // s) * Wph + (dw // s))

        # Channel-block width: 256 matches the v6e/v7x MXU output width when possible.
        tc = 256 if (C_out_pad % 256 == 0) else 128
        n_cb = C_out_pad // tc

        kernel1 = functools.partial(
            _conv_stats_shift_kernel, tap_phase=tuple(tap_phase), tap_off=tuple(tap_off),
            m_img=m_img, w_out=W_out, wph=Wph)

        y, psum, pssq = pl.pallas_call(
            kernel1,
            out_shape=(
                jax.ShapeDtypeStruct((N, m_img, C_out_pad), compute_dtype),
                jax.ShapeDtypeStruct((N, 8, C_out_pad), jnp.float32),
                jax.ShapeDtypeStruct((N, 8, C_out_pad), jnp.float32),
            ),
            grid_spec=pltpu.PrefetchScalarGridSpec(
                num_scalar_prefetch=0,
                grid=(N, n_cb),          # c innermost -> x block re-use across c steps
                in_specs=[
                    pl.BlockSpec((s * s, 1, L, C_in), lambda n, c: (0, n, 0, 0)),
                    pl.BlockSpec((9, C_in, tc), lambda n, c: (0, 0, c)),
                ],
                out_specs=[
                    pl.BlockSpec((1, m_img, tc), lambda n, c: (n, 0, c)),
                    pl.BlockSpec((1, 8, tc), lambda n, c: (n, 0, c)),
                    pl.BlockSpec((1, 8, tc), lambda n, c: (n, 0, c)),
                ],
            ),
            compiler_params=pltpu.CompilerParams(
                dimension_semantics=("parallel", "parallel"),
                vmem_limit_bytes=vmem_limit),
        )(xph, w_taps)
        csum = jnp.sum(psum[:, 0, :], axis=0)
        cssq = jnp.sum(pssq[:, 0, :], axis=0)
        m_rows = m_img

    # ---- glue: per-channel BN scalars (training mode, biased variance) ----
    m_valid = float(N * H_out * W_out)
    mean = csum / m_valid
    var = jnp.maximum(cssq / m_valid - mean * mean, 0.0)
    inv_std = jax.lax.rsqrt(var + eps)
    gamma_p = jnp.pad(gamma.astype(jnp.float32), (0, C_out_pad - C_out), constant_values=1.0)
    beta_p = jnp.pad(beta.astype(jnp.float32), (0, C_out_pad - C_out))
    scale = (gamma_p * inv_std).reshape(1, 1, C_out_pad)
    shift = (beta_p - mean * gamma_p * inv_std).reshape(1, 1, C_out_pad)

    # ---- Pallas kernel 2: normalize + affine + LeakyReLU, big lane-dense tiles ----
    ybytes = jnp.dtype(compute_dtype).itemsize
    tm2 = (8 * 1024 * 1024) // (C_out_pad * (ybytes + 4))   # ~8 MiB of data per step
    tm2 = max(512, min(tm2, 8 * 1024))
    tm2 = min(tm2, _round_up(m_rows, 8))
    tm2 = max(8, (tm2 // 8) * 8)

    out_flat = pl.pallas_call(
        functools.partial(_bn_lrelu_kernel, negative_slope=negative_slope),
        out_shape=jax.ShapeDtypeStruct((N, m_rows, C_out_pad), jnp.float32),
        grid_spec=pltpu.PrefetchScalarGridSpec(
            num_scalar_prefetch=0,
            grid=(N, pl.cdiv(m_rows, tm2)),
            in_specs=[
                pl.BlockSpec((1, tm2, C_out_pad), lambda n, i: (n, i, 0)),
                pl.BlockSpec((1, 1, C_out_pad), lambda n, i: (0, 0, 0)),
                pl.BlockSpec((1, 1, C_out_pad), lambda n, i: (0, 0, 0)),
            ],
            out_specs=pl.BlockSpec((1, tm2, C_out_pad), lambda n, i: (n, i, 0)),
        ),
        compiler_params=pltpu.CompilerParams(
            dimension_semantics=("parallel", "parallel"),
            vmem_limit_bytes=vmem_limit),
    )(y, scale, shift)

    # ---- glue: crop padded rows / junk columns / padded channels, back to NCHW ----
    if fold_taps:
        out = out_flat[:, :H_out * W_out, :C_out].reshape(N, H_out, W_out, C_out)
    else:
        out = out_flat.reshape(N, H_out, Wph, C_out_pad)[:, :, :W_out, :C_out]
    return jnp.transpose(out, (0, 3, 1, 2))


block_forward = jax.jit(
    _block_forward,
    static_argnames=("stride", "eps", "negative_slope", "compute_dtype", "fold_taps"))


# ---------------------------------------------------------------------------
# Pure-JAX reference (for correctness check)
# ---------------------------------------------------------------------------
def block_forward_ref(x_nchw, conv_w, conv_b, gamma, beta, *, stride, eps=1e-5,
                      negative_slope=0.2):
    y = jax.lax.conv_general_dilated(
        x_nchw.astype(jnp.float32), conv_w.astype(jnp.float32),
        window_strides=(stride, stride), padding=((1, 1), (1, 1)),
        dimension_numbers=("NCHW", "OIHW", "NCHW"))
    y = y + conv_b.reshape(1, -1, 1, 1)
    mean = jnp.mean(y, axis=(0, 2, 3), keepdims=True)
    var = jnp.mean((y - mean) ** 2, axis=(0, 2, 3), keepdims=True)  # biased, like torch BN
    z = (y - mean) / jnp.sqrt(var + eps)
    z = z * gamma.reshape(1, -1, 1, 1) + beta.reshape(1, -1, 1, 1)
    return jnp.where(z >= 0, z, negative_slope * z)


if __name__ == "__main__":
    key = jax.random.PRNGKey(0)
    k_x, k_w, k_b, k_g, k_bt = jax.random.split(key, 5)

    N, C_in, C_out, H, W = 2, 4, 8, 16, 16

    x = jax.random.normal(k_x, (N, C_in, H, W), dtype=jnp.float32)
    conv_w = 0.1 * jax.random.normal(k_w, (C_out, C_in, 3, 3), dtype=jnp.float32)
    conv_b = 0.1 * jax.random.normal(k_b, (C_out,), dtype=jnp.float32)
    gamma = 1.0 + 0.1 * jax.random.normal(k_g, (C_out,), dtype=jnp.float32)
    beta = 0.1 * jax.random.normal(k_bt, (C_out,), dtype=jnp.float32)

    ok = True
    for stride in (1, 2):
        ref = jax.block_until_ready(
            block_forward_ref(x, conv_w, conv_b, gamma, beta, stride=stride))

        # f32 compute path, both conv strategies: tight structural check vs XLA ref.
        for fold in (True, False):
            out32 = jax.block_until_ready(
                block_forward(x, conv_w, conv_b, gamma, beta, stride=stride,
                              compute_dtype=jnp.float32, fold_taps=fold))
            ok &= (out32.shape == ref.shape)
            ok &= bool(jnp.allclose(out32, ref, atol=1e-4, rtol=1e-4))

        # default bf16 MXU path (auto strategy): looser tolerance (bf16 rounding).
        outbf = jax.block_until_ready(
            block_forward(x, conv_w, conv_b, gamma, beta, stride=stride))
        ok &= (outbf.shape == ref.shape)
        ok &= bool(jnp.allclose(outbf, ref, atol=3e-2, rtol=3e-2))

    print("KERNEL_OK" if ok else "KERNEL_MISMATCH")
</pallas_src>

<mosaic_0001>
module attributes {stable_mosaic.version = 11 : i64} {
  func.func @_conv_stats_fold_kernel(%arg0: i32, %arg1: i32, %arg2: memref<1x256x36xf32, #tpu.memory_space<vmem>>, %arg3: memref<36x128xf32, #tpu.memory_space<vmem>>, %arg4: memref<1x256x128xf32, #tpu.memory_space<vmem>>, %arg5: memref<1x1x8x128xf32, #tpu.memory_space<vmem>>, %arg6: memref<1x1x8x128xf32, #tpu.memory_space<vmem>>) attributes {dimension_semantics = [#tpu.dimension_semantics<parallel>, #tpu.dimension_semantics<parallel>], iteration_bounds = array<i64: 2, 1>, scalar_prefetch = 0 : i64, scratch_operands = 0 : i64, tpu.core_type = #tpu.core_type<tc>, window_params = [{transform_indices = @transform_0, window_bounds = array<i64: 1, 256, 36>}, {pipeline_mode = #tpu.pipeline_mode<synchronous>, transform_indices = @transform_1, window_bounds = array<i64: 36, 128>}, {transform_indices = @transform_2, window_bounds = array<i64: 1, 256, 128>}, {transform_indices = @transform_3, window_bounds = array<i64: 1, 1, 8, 128>}, {transform_indices = @transform_4, window_bounds = array<i64: 1, 1, 8, 128>}]} {
    %c0 = arith.constant 0 : index
    %c0_0 = arith.constant 0 : index
    %c0_1 = arith.constant 0 : index
    %0 = vector.load %arg2[%c0, %c0_0, %c0_1] : memref<1x256x36xf32, #tpu.memory_space<vmem>>, vector<1x256x36xf32>
    %1 = vector.shape_cast %0 : vector<1x256x36xf32> to vector<256x36xf32>
    %c0_2 = arith.constant 0 : index
    %c0_3 = arith.constant 0 : index
    %2 = vector.load %arg3[%c0_2, %c0_3] : memref<36x128xf32, #tpu.memory_space<vmem>>, vector<36x128xf32>
    %cst = arith.constant dense<0.000000e+00> : vector<256x128xf32>
    %3 = tpu.matmul %1, %2, %cst {dimension_numbers = #tpu.dot_dimension_numbers<[1], [0], [0], [1], [0, 0, 1, 1], [], []>} : vector<256x36xf32>, vector<36x128xf32>, vector<256x128xf32> -> vector<256x128xf32>
    %c0_4 = arith.constant 0 : index
    %c0_5 = arith.constant 0 : index
    %c0_6 = arith.constant 0 : index
    %4 = vector.load %arg4[%c0_4, %c0_5, %c0_6] : memref<1x256x128xf32, #tpu.memory_space<vmem>>, vector<1x256x128xf32>
    %5 = vector.shape_cast %4 : vector<1x256x128xf32> to vector<256x128xf32>
    %6 = vector.shape_cast %3 : vector<256x128xf32> to vector<1x256x128xf32>
    tpu.vector_store %arg4[%c0_4, %c0_5, %c0_6], %6 {strides = array<i32>} : memref<1x256x128xf32, #tpu.memory_space<vmem>>, vector<1x256x128xf32>,
    %cst_7 = arith.constant dense<0.000000e+00> : vector<128xf32>
    %7 = vector.multi_reduction <add>, %3, %cst_7 [0] : vector<256x128xf32> to vector<128xf32>
    %8 = vector.shape_cast %7 : vector<128xf32> to vector<1x128xf32>
    %9 = arith.mulf %3, %3 : vector<256x128xf32>
    %cst_8 = arith.constant dense<0.000000e+00> : vector<128xf32>
    %10 = vector.multi_reduction <add>, %9, %cst_8 [0] : vector<256x128xf32> to vector<128xf32>
    %11 = vector.shape_cast %10 : vector<128xf32> to vector<1x128xf32>
    %12 = vector.shape_cast %8 : vector<1x128xf32> to vector<1x128xf32>
    %13 = vector.broadcast %12 : vector<1x128xf32> to vector<8x128xf32>
    %c0_9 = arith.constant 0 : index
    %c0_10 = arith.constant 0 : index
    %c0_11 = arith.constant 0 : index
    %c0_12 = arith.constant 0 : index
    %14 = vector.load %arg5[%c0_9, %c0_10, %c0_11, %c0_12] : memref<1x1x8x128xf32, #tpu.memory_space<vmem>>, vector<1x1x8x128xf32>
    %15 = vector.shape_cast %14 : vector<1x1x8x128xf32> to vector<8x128xf32>
    %16 = vector.shape_cast %13 : vector<8x128xf32> to vector<1x1x8x128xf32>
    tpu.vector_store %arg5[%c0_9, %c0_10, %c0_11, %c0_12], %16 {strides = array<i32>} : memref<1x1x8x128xf32, #tpu.memory_space<vmem>>, vector<1x1x8x128xf32>,
    %17 = vector.shape_cast %11 : vector<1x128xf32> to vector<1x128xf32>
    %18 = vector.broadcast %17 : vector<1x128xf32> to vector<8x128xf32>
    %c0_13 = arith.constant 0 : index
    %c0_14 = arith.constant 0 : index
    %c0_15 = arith.constant 0 : index
    %c0_16 = arith.constant 0 : index
    %19 = vector.load %arg6[%c0_13, %c0_14, %c0_15, %c0_16] : memref<1x1x8x128xf32, #tpu.memory_space<vmem>>, vector<1x1x8x128xf32>
    %20 = vector.shape_cast %19 : vector<1x1x8x128xf32> to vector<8x128xf32>
    %21 = vector.shape_cast %18 : vector<8x128xf32> to vector<1x1x8x128xf32>
    tpu.vector_store %arg6[%c0_13, %c0_14, %c0_15, %c0_16], %21 {strides = array<i32>} : memref<1x1x8x128xf32, #tpu.memory_space<vmem>>, vector<1x1x8x128xf32>,
    return
  }
  func.func @transform_0(%arg0: i32, %arg1: i32) -> (i32, i32, i32) {
    %c0_i32 = arith.constant 0 : i32
    %c0_i32_0 = arith.constant 0 : i32
    return %arg0, %arg1, %c0_i32 : i32, i32, i32
  }
  func.func @transform_1(%arg0: i32, %arg1: i32) -> (i32, i32) {
    %c0_i32 = arith.constant 0 : i32
    %c0_i32_0 = arith.constant 0 : i32
    %c0_i32_1 = arith.constant 0 : i32
    return %c0_i32, %c0_i32_0 : i32, i32
  }
  func.func @transform_2(%arg0: i32, %arg1: i32) -> (i32, i32, i32) {
    %c0_i32 = arith.constant 0 : i32
    %c0_i32_0 = arith.constant 0 : i32
    return %arg0, %arg1, %c0_i32 : i32, i32, i32
  }
  func.func @transform_3(%arg0: i32, %arg1: i32) -> (i32, i32, i32, i32) {
    %c0_i32 = arith.constant 0 : i32
    %c0_i32_0 = arith.constant 0 : i32
    %c0_i32_1 = arith.constant 0 : i32
    return %arg0, %arg1, %c0_i32, %c0_i32_0 : i32, i32, i32, i32
  }
  func.func @transform_4(%arg0: i32, %arg1: i32) -> (i32, i32, i32, i32) {
    %c0_i32 = arith.constant 0 : i32
    %c0_i32_0 = arith.constant 0 : i32
    %c0_i32_1 = arith.constant 0 : i32
    return %arg0, %arg1, %c0_i32, %c0_i32_0 : i32, i32, i32, i32
  }
}

module attributes {stable_mosaic.version = 11 : i64} {
  func.func @_bn_lrelu_kernel(%arg0: i32, %arg1: i32, %arg2: memref<1x256x128xf32, #tpu.memory_space<vmem>>, %arg3: memref<1x1x128xf32, #tpu.memory_space<vmem>>, %arg4: memref<1x1x128xf32, #tpu.memory_space<vmem>>, %arg5: memref<1x256x128xf32, #tpu.memory_space<vmem>>) attributes {dimension_semantics = [#tpu.dimension_semantics<parallel>, #tpu.dimension_semantics<parallel>], iteration_bounds = array<i64: 2, 1>, scalar_prefetch = 0 : i64, scratch_operands = 0 : i64, tpu.core_type = #tpu.core_type<tc>, window_params = [{transform_indices = @transform_0, window_bounds = array<i64: 1, 256, 128>}, {pipeline_mode = #tpu.pipeline_mode<synchronous>, transform_indices = @transform_1, window_bounds = array<i64: 1, 1, 128>}, {pipeline_mode = #tpu.pipeline_mode<synchronous>, transform_indices = @transform_2, window_bounds = array<i64: 1, 1, 128>}, {transform_indices = @transform_3, window_bounds = array<i64: 1, 256, 128>}]} {
    %c0 = arith.constant 0 : index
    %c0_0 = arith.constant 0 : index
    %c0_1 = arith.constant 0 : index
    %0 = vector.load %arg2[%c0, %c0_0, %c0_1] : memref<1x256x128xf32, #tpu.memory_space<vmem>>, vector<1x256x128xf32>
    %c0_2 = arith.constant 0 : index
    %c0_3 = arith.constant 0 : index
    %c0_4 = arith.constant 0 : index
    %1 = vector.load %arg3[%c0_2, %c0_3, %c0_4] : memref<1x1x128xf32, #tpu.memory_space<vmem>>, vector<1x1x128xf32>
    %2 = vector.broadcast %1 : vector<1x1x128xf32> to vector<1x256x128xf32>
    %3 = arith.mulf %0, %2 : vector<1x256x128xf32>
    %c0_5 = arith.constant 0 : index
    %c0_6 = arith.constant 0 : index
    %c0_7 = arith.constant 0 : index
    %4 = vector.load %arg4[%c0_5, %c0_6, %c0_7] : memref<1x1x128xf32, #tpu.memory_space<vmem>>, vector<1x1x128xf32>
    %5 = vector.broadcast %4 : vector<1x1x128xf32> to vector<1x256x128xf32>
    %6 = arith.addf %3, %5 : vector<1x256x128xf32>
    %cst = arith.constant 0.000000e+00 : f32
    %7 = vector.broadcast %cst : f32 to vector<1x256x128xf32>
    %8 = arith.cmpf oge, %6, %7 : vector<1x256x128xf32>
    %cst_8 = arith.constant 2.000000e-01 : f32
    %9 = vector.broadcast %cst_8 : f32 to vector<1x256x128xf32>
    %10 = arith.mulf %9, %6 : vector<1x256x128xf32>
    %11 = arith.select %8, %6, %10 : vector<1x256x128xi1>, vector<1x256x128xf32>
    %c0_9 = arith.constant 0 : index
    %c0_10 = arith.constant 0 : index
    %c0_11 = arith.constant 0 : index
    %12 = vector.load %arg5[%c0_9, %c0_10, %c0_11] : memref<1x256x128xf32, #tpu.memory_space<vmem>>, vector<1x256x128xf32>
    tpu.vector_store %arg5[%c0_9, %c0_10, %c0_11], %11 {strides = array<i32>} : memref<1x256x128xf32, #tpu.memory_space<vmem>>, vector<1x256x128xf32>,
    return
  }
  func.func @transform_0(%arg0: i32, %arg1: i32) -> (i32, i32, i32) {
    %c0_i32 = arith.constant 0 : i32
    %c0_i32_0 = arith.constant 0 : i32
    return %arg0, %arg1, %c0_i32 : i32, i32, i32
  }
  func.func @transform_1(%arg0: i32, %arg1: i32) -> (i32, i32, i32) {
    %c0_i32 = arith.constant 0 : i32
    %c0_i32_0 = arith.constant 0 : i32
    %c0_i32_1 = arith.constant 0 : i32
    %c0_i32_2 = arith.constant 0 : i32
    return %c0_i32, %c0_i32_0, %c0_i32_1 : i32, i32, i32
  }
  func.func @transform_2(%arg0: i32, %arg1: i32) -> (i32, i32, i32) {
    %c0_i32 = arith.constant 0 : i32
    %c0_i32_0 = arith.constant 0 : i32
    %c0_i32_1 = arith.constant 0 : i32
    %c0_i32_2 = arith.constant 0 : i32
    return %c0_i32, %c0_i32_0, %c0_i32_1 : i32, i32, i32
  }
  func.func @transform_3(%arg0: i32, %arg1: i32) -> (i32, i32, i32) {
    %c0_i32 = arith.constant 0 : i32
    %c0_i32_0 = arith.constant 0 : i32
    return %arg0, %arg1, %c0_i32 : i32, i32, i32
  }
}

</mosaic_0001>

<llo_original>
// kernel: _block_forward.3
$region0: #{_block_forward.3}
  #allocation0 [shape = 'u32[]', space=smem, size = 0x4, offset = 0x4, fixed_abs, tag = 'smem constant byte address 0x4 - core index']
  #allocation1 [shape = 'u32[72,128]{1,0:T(1,128)}', space=vmem, size = 0x9000, scoped, tag = 'internal scratch']
  %s0 = inlined_call_operand.vmem [shape: f32[2,256,128], index: 0, kind: input, shape index: {}]
  %s1 = inlined_call_operand.vmem [shape: f32[1,1,128], index: 1, kind: input, shape index: {}]
  %s2 = inlined_call_operand.vmem [shape: f32[1,1,128], index: 2, kind: input, shape index: {}]
  %s3 = inlined_call_operand.vmem [shape: f32[2,256,128], index: 3, kind: output, shape index: {}]
  %s4 = sld [smem:[#allocation0]]
  $region45: #{_block_forward.3} parent=0
    _
  %s6 = ssub.s32 1, %s4
  %s7 = scalar_select 0, %s6, %s4
  loop: start=0, step=1, limit=4
  $region2: #{_block_forward.3} parent=0 // loop_pre_header
    _
  $region3: #{_block_forward.3} parent=0 // loop_header
    %s9 = sphi 0, %s13
    %p10 = scmp.ge.s32.totalorder %s9, 4
    %s16 = sphi 0, %s28
    %s17 = sphi 0, %s24
    %s18 = sphi 0, %s16
    %s19 = sphi 0, %s17
    %s20 = sphi 0, %s18
    %s21 = sphi 0, %s19
    %s33 = sphi 0, %s35
    %s36 = sphi 0, %s33
    %s37 = sphi 0, %s36
    %s53 = sphi 0, %s37
    %s57 = sphi 0, %s57
    %s59 = sphi 0, %s57
    %s60 = sphi 0, %s59
    %s74 = sphi 0, %s60
    %s78 = sphi 0, %s78
    %s80 = sphi 0, %s78
    %s81 = sphi 0, %s80
    %s95 = sphi 0, %s81
    %s103 = sphi 0, %s105
    %s106 = sphi 0, %s103
    %s107 = sphi 0, %s106
    %s123 = sphi 0, %s107
  $region4: #{_block_forward.3} parent=0 // loop_header_branch
    %12 = sbr.rel (%p10) target = $region8
  $region5: #{_block_forward.3} parent=0 // loop_body
    %s14 = ssub.s32 %s9, 1
    %s15 = ssub.s32 %s9, 2
    %s22 = sadd.s32 1, %s17
    %p23 = scmp.ge.s32.totalorder %s22, 1
    %s24 = scalar_select %p23, 0, %s22
    %s25 = sadd.s32 1, %s16
    %s26 = scalar_select %p23, %s25, %s16
    %p27 = scmp.ge.s32.totalorder %s26, 2
    %s28 = scalar_select %p27, 0, %s26
    %s29 = ssub.s32 %s16, %s28
    %s30 = ssub.s32 %s17, %s24
    %s31 = sor.u32 %s29, %s30
    %p32 = scmp.eq.s32.totalorder %s31, 0
    %s34 = sadd.s32 %s33, 1
    %s35 = scalar_select %p32, %s33, %s34
    %p38 = pneg %p32
    %p39 = scmp.eq.s32.totalorder %s9, 1
    %p40 = por %p38, %p39
    %p41 = scmp.ne.s32.totalorder %s33, %s36
    %p42 = scmp.eq.s32.totalorder %s9, 0
    %p43 = por %p41, %p42
    %p44 = scmp.ne.s32.totalorder %s33, %s36
    %p45 = scmp.eq.s32.totalorder %s14, 1
    %p46 = por %p44, %p45
    %p47 = scmp.ne.s32.totalorder %s36, %s37
    %p48 = scmp.eq.s32.totalorder %s14, 0
    %p49 = por %p47, %p48
    %p50 = scmp.ne.s32.totalorder %s36, %s37
    %p51 = scmp.eq.s32.totalorder %s15, 1
    %p52 = por %p50, %p51
    %p54 = scmp.ne.s32.totalorder %s37, %s53
    %p55 = scmp.eq.s32.totalorder %s15, 0
    %p56 = por %p54, %p55
    %s58 = sadd.s32 %s57, 1
    %p61 = scmp.eq.s32.totalorder %s9, 1
    %p62 = scmp.ne.s32.totalorder %s57, %s59
    %p63 = scmp.eq.s32.totalorder %s9, 0
    %p64 = por %p62, %p63
    %p65 = scmp.ne.s32.totalorder %s57, %s59
    %p66 = scmp.eq.s32.totalorder %s14, 1
    %p67 = por %p65, %p66
    %p68 = scmp.ne.s32.totalorder %s59, %s60
    %p69 = scmp.eq.s32.totalorder %s14, 0
    %p70 = por %p68, %p69
    %p71 = scmp.ne.s32.totalorder %s59, %s60
    %p72 = scmp.eq.s32.totalorder %s15, 1
    %p73 = por %p71, %p72
    %p75 = scmp.ne.s32.totalorder %s60, %s74
    %p76 = scmp.eq.s32.totalorder %s15, 0
    %p77 = por %p75, %p76
    %s79 = sadd.s32 %s78, 1
    %p82 = scmp.eq.s32.totalorder %s9, 1
    %p83 = scmp.ne.s32.totalorder %s78, %s80
    %p84 = scmp.eq.s32.totalorder %s9, 0
    %p85 = por %p83, %p84
    %p86 = scmp.ne.s32.totalorder %s78, %s80
    %p87 = scmp.eq.s32.totalorder %s14, 1
    %p88 = por %p86, %p87
    %p89 = scmp.ne.s32.totalorder %s80, %s81
    %p90 = scmp.eq.s32.totalorder %s14, 0
    %p91 = por %p89, %p90
    %p92 = scmp.ne.s32.totalorder %s80, %s81
    %p93 = scmp.eq.s32.totalorder %s15, 1
    %p94 = por %p92, %p93
    %p96 = scmp.ne.s32.totalorder %s81, %s95
    %p97 = scmp.eq.s32.totalorder %s15, 0
    %p98 = por %p96, %p97
    %s99 = ssub.s32 %s16, %s28
    %s100 = ssub.s32 %s17, %s24
    %s101 = sor.u32 %s99, %s100
    %p102 = scmp.eq.s32.totalorder %s101, 0
    %s104 = sadd.s32 %s103, 1
    %s105 = scalar_select %p102, %s103, %s104
    %p108 = pneg %p102
    %p109 = scmp.eq.s32.totalorder %s9, 1
    %p110 = por %p108, %p109
    %p111 = scmp.ne.s32.totalorder %s103, %s106
    %p112 = scmp.eq.s32.totalorder %s9, 0
    %p113 = por %p111, %p112
    %p114 = scmp.ne.s32.totalorder %s103, %s106
    %p115 = scmp.eq.s32.totalorder %s14, 1
    %p116 = por %p114, %p115
    %p117 = scmp.ne.s32.totalorder %s106, %s107
    %p118 = scmp.eq.s32.totalorder %s14, 0
    %p119 = por %p117, %p118
    %p120 = scmp.ne.s32.totalorder %s106, %s107
    %p121 = scmp.eq.s32.totalorder %s15, 1
    %p122 = por %p120, %p121
    %p124 = scmp.ne.s32.totalorder %s107, %s123
    %p125 = scmp.eq.s32.totalorder %s15, 0
    %p126 = por %p124, %p125
    %p127 = scmp.le.s32.totalorder 1, %s9
    %p128 = scmp.lt.s32.totalorder %s9, 3
    %p129 = pnand %p127, %p128
    %p130 = pneg %p129
    // Predicated region
    $region9: #{_block_forward.3} parent=5 // pred_check
      _
    $region10: #{_block_forward.3} parent=5 // pred_check_branch
      %132 = sbr.rel (%p129) target = $region12
    $region11: #{_block_forward.3} parent=5 // pred_region
      %s133 = ssub.s32 %s9, 1
      // Predicated region
      $region13: #{_block_forward.3} parent=11 // pred_check
        %p134 = pneg %p70
      $region14: #{_block_forward.3} parent=11 // pred_check_branch
        %136 = sbr.rel (%p134) target = $region16
      $region15: #{_block_forward.3} parent=11 // pred_region
        _
      $region16: #{_block_forward.3} parent=11 // pred_fallthru
        _
      // Predicated region
      $region17: #{_block_forward.3} parent=11 // pred_check
        %p137 = pneg %p91
      $region18: #{_block_forward.3} parent=11 // pred_check_branch
        %139 = sbr.rel (%p137) target = $region20
      $region19: #{_block_forward.3} parent=11 // pred_region
        _
      $region20: #{_block_forward.3} parent=11 // pred_fallthru
        _
    $region12: #{_block_forward.3} parent=5 // pred_fallthru
      _
    %p140 = scmp.lt.s32.totalorder %s9, 2
    // Predicated region
    $region21: #{_block_forward.3} parent=5 // pred_check
      %p141 = pneg %p140
    $region22: #{_block_forward.3} parent=5 // pred_check_branch
      %143 = sbr.rel (%p141) target = $region24
    $region23: #{_block_forward.3} parent=5 // pred_region
      // Predicated region
      $region25: #{_block_forward.3} parent=23 // pred_check
        %p144 = pneg %p43
      $region26: #{_block_forward.3} parent=23 // pred_check_branch
        %146 = sbr.rel (%p144) target = $region28
      $region27: #{_block_forward.3} parent=23 // pred_region
        %s147 = smul.u32 32, %s17
        %p148 = scmp.lt.s32.totalorder %s16, 1
        %s149 = scalar_select %p148, %s16, 1
        %p150 = scmp.lt.s32.totalorder %s147, 31
        %s151 = scalar_select %p150, %s147, 31
        %s152 = smul.addr %s149, 32
        %s153 = sadd.s32 %s151, %s152
        %s154 = smul.addr %s153, 8
        %s155 = scalar_lea.vmem %s0, %s154
        %s156 = smul.u32 32, %s17
      $region28: #{_block_forward.3} parent=23 // pred_fallthru
        _
    $region24: #{_block_forward.3} parent=5 // pred_fallthru
      _
    %p157 = scmp.le.s32.totalorder 1, %s9
    %p158 = scmp.lt.s32.totalorder %s9, 3
    %p159 = pnand %p157, %p158
    %p160 = pneg %p159
    // Predicated region
    $region29: #{_block_forward.3} parent=5 // pred_check
      _
    $region30: #{_block_forward.3} parent=5 // pred_check_branch
      %162 = sbr.rel (%p159) target = $region32
    $region31: #{_block_forward.3} parent=5 // pred_region
      %s163 = ssub.s32 %s9, 1
      %s164 = smul.u32 32, %s19
      %p165 = scmp.lt.s32.totalorder %s18, 1
      %s166 = scalar_select %p165, %s18, 1
      %p167 = scmp.lt.s32.totalorder %s164, 31
      %s168 = scalar_select %p167, %s164, 31
      %s169 = smul.addr %s166, 32
      %s170 = sadd.s32 %s168, %s169
      %s171 = smul.addr %s170, 8
      %s172 = scalar_lea.vmem %s0, %s171
      %p173 = pneg %p49
      %p174 = pneg %p46
      %p175 = pneg %p70
      %p176 = pneg %p67
      %p177 = pneg %p91
      %p178 = pneg %p88
      %p179 = pneg %p119
      %p180 = pneg %p116
      %s181 = smul.u32 32, %s19
      %p182 = scmp.lt.s32.totalorder %s18, 1
      %s183 = scalar_select %p182, %s18, 1
      %p184 = scmp.lt.s32.totalorder %s181, 31
      %s185 = scalar_select %p184, %s181, 31
      %s186 = smul.addr %s183, 32
      %s187 = sadd.s32 %s185, %s186
      %s188 = smul.addr %s187, 8
      %s189 = scalar_lea.vmem %s3, %s188
      %s190 = smul.u32 32, %s19
      %p191 = scmp.lt.s32.totalorder %s18, 1
      %s192 = scalar_select %p191, %s18, 1
      %p193 = scmp.lt.s32.totalorder %s190, 31
      %s194 = scalar_select %p193, %s190, 31
      %s195 = smul.addr %s192, 32
      %s196 = sadd.s32 %s194, %s195
      %s197 = smul.addr %s196, 8
      %s198 = scalar_lea.vmem %s0, %s197
      %s199 = smul.u32 32, %s19
      %s200 = smul.u32 32, %s19
      %p201 = scmp.lt.s32.totalorder %s18, 1
      %s202 = scalar_select %p201, %s18, 1
      %p203 = scmp.lt.s32.totalorder %s200, 31
      %s204 = scalar_select %p203, %s200, 31
      %s205 = smul.addr %s202, 32
      %s206 = sadd.s32 %s204, %s205
      %s207 = smul.addr %s206, 8
      %s208 = scalar_lea.vmem %s3, %s207
      %s209 = smul.u32 32, %s19
      %v210 = vld [vmem:[%s198] sm:$0xff]
      %v211 = vld [vmem:[%s198 + $0x8] sm:$0xff]
      %v212 = vld [vmem:[%s198 + $0x10] sm:$0xff]
      %v213 = vld [vmem:[%s198 + $0x18] sm:$0xff]
      %v214 = vld [vmem:[%s198 + $0x20] sm:$0xff]
      %v215 = vld [vmem:[%s198 + $0x28] sm:$0xff]
      %v216 = vld [vmem:[%s198 + $0x30] sm:$0xff]
      %v217 = vld [vmem:[%s198 + $0x38] sm:$0xff]
      %v218 = vld [vmem:[%s198 + $0x40] sm:$0xff]
      %v219 = vld [vmem:[%s198 + $0x48] sm:$0xff]
      %v220 = vld [vmem:[%s198 + $0x50] sm:$0xff]
      %v221 = vld [vmem:[%s198 + $0x58] sm:$0xff]
      %v222 = vld [vmem:[%s198 + $0x60] sm:$0xff]
      %v223 = vld [vmem:[%s198 + $0x68] sm:$0xff]
      %v224 = vld [vmem:[%s198 + $0x70] sm:$0xff]
      %v225 = vld [vmem:[%s198 + $0x78] sm:$0xff]
      %v226 = vld [vmem:[%s198 + $0x80] sm:$0xff]
      %v227 = vld [vmem:[%s198 + $0x88] sm:$0xff]
      %v228 = vld [vmem:[%s198 + $0x90] sm:$0xff]
      %v229 = vld [vmem:[%s198 + $0x98] sm:$0xff]
      %v230 = vld [vmem:[%s198 + $0xa0] sm:$0xff]
      %v231 = vld [vmem:[%s198 + $0xa8] sm:$0xff]
      %v232 = vld [vmem:[%s198 + $0xb0] sm:$0xff]
      %v233 = vld [vmem:[%s198 + $0xb8] sm:$0xff]
      %v234 = vld [vmem:[%s198 + $0xc0] sm:$0xff]
      %v235 = vld [vmem:[%s198 + $0xc8] sm:$0xff]
      %v236 = vld [vmem:[%s198 + $0xd0] sm:$0xff]
      %v237 = vld [vmem:[%s198 + $0xd8] sm:$0xff]
      %v238 = vld [vmem:[%s198 + $0xe0] sm:$0xff]
      %v239 = vld [vmem:[%s198 + $0xe8] sm:$0xff]
      %v240 = vld [vmem:[%s198 + $0xf0] sm:$0xff]
      %v241 = vld [vmem:[%s198 + $0xf8] sm:$0xff]
      %v242 = vld [vmem:[%s1] sm:$0x1]
      %v244 = vperm.slane %v242, 0
      %v246 = vmul.f32 %v210, %v244
      %v247 = vmul.f32 %v211, %v244
      %v248 = vmul.f32 %v212, %v244
      %v249 = vmul.f32 %v213, %v244
      %v250 = vmul.f32 %v214, %v244
      %v251 = vmul.f32 %v215, %v244
      %v252 = vmul.f32 %v216, %v244
      %v253 = vmul.f32 %v217, %v244
      %v254 = vmul.f32 %v218, %v244
      %v255 = vmul.f32 %v219, %v244
      %v256 = vmul.f32 %v220, %v244
      %v257 = vmul.f32 %v221, %v244
      %v258 = vmul.f32 %v222, %v244
      %v259 = vmul.f32 %v223, %v244
      %v260 = vmul.f32 %v224, %v244
      %v261 = vmul.f32 %v225, %v244
      %v262 = vmul.f32 %v226, %v244
      %v263 = vmul.f32 %v227, %v244
      %v264 = vmul.f32 %v228, %v244
      %v265 = vmul.f32 %v229, %v244
      %v266 = vmul.f32 %v230, %v244
      %v267 = vmul.f32 %v231, %v244
      %v268 = vmul.f32 %v232, %v244
      %v269 = vmul.f32 %v233, %v244
      %v270 = vmul.f32 %v234, %v244
      %v271 = vmul.f32 %v235, %v244
      %v272 = vmul.f32 %v236, %v244
      %v273 = vmul.f32 %v237, %v244
      %v274 = vmul.f32 %v238, %v244
      %v275 = vmul.f32 %v239, %v244
      %v276 = vmul.f32 %v240, %v244
      %v277 = vmul.f32 %v241, %v244
      %v278 = vld [vmem:[%s2] sm:$0x1]
      %v280 = vperm.slane %v278, 0
      %v282 = vadd.f32 %v246, %v280
      %v283 = vadd.f32 %v247, %v280
      %v284 = vadd.f32 %v248, %v280
      %v285 = vadd.f32 %v249, %v280
      %v286 = vadd.f32 %v250, %v280
      %v287 = vadd.f32 %v251, %v280
      %v288 = vadd.f32 %v252, %v280
      %v289 = vadd.f32 %v253, %v280
      %v290 = vadd.f32 %v254, %v280
      %v291 = vadd.f32 %v255, %v280
      %v292 = vadd.f32 %v256, %v280
      %v293 = vadd.f32 %v257, %v280
      %v294 = vadd.f32 %v258, %v280
      %v295 = vadd.f32 %v259, %v280
      %v296 = vadd.f32 %v260, %v280
      %v297 = vadd.f32 %v261, %v280
      %v298 = vadd.f32 %v262, %v280
      %v299 = vadd.f32 %v263, %v280
      %v300 = vadd.f32 %v264, %v280
      %v301 = vadd.f32 %v265, %v280
      %v302 = vadd.f32 %v266, %v280
      %v303 = vadd.f32 %v267, %v280
      %v304 = vadd.f32 %v268, %v280
      %v305 = vadd.f32 %v269, %v280
      %v306 = vadd.f32 %v270, %v280
      %v307 = vadd.f32 %v271, %v280
      %v308 = vadd.f32 %v272, %v280
      %v309 = vadd.f32 %v273, %v280
      %v310 = vadd.f32 %v274, %v280
      %v311 = vadd.f32 %v275, %v280
      %v312 = vadd.f32 %v276, %v280
      %v313 = vadd.f32 %v277, %v280
      %vm314 = vcmp.ge.f32.partialorder %v282, 0.0
      %vm315 = vcmp.ge.f32.partialorder %v283, 0.0
      %vm316 = vcmp.ge.f32.partialorder %v284, 0.0
      %vm317 = vcmp.ge.f32.partialorder %v285, 0.0
      %vm318 = vcmp.ge.f32.partialorder %v286, 0.0
      %vm319 = vcmp.ge.f32.partialorder %v287, 0.0
      %vm320 = vcmp.ge.f32.partialorder %v288, 0.0
      %vm321 = vcmp.ge.f32.partialorder %v289, 0.0
      %vm322 = vcmp.ge.f32.partialorder %v290, 0.0
      %vm323 = vcmp.ge.f32.partialorder %v291, 0.0
      %vm324 = vcmp.ge.f32.partialorder %v292, 0.0
      %vm325 = vcmp.ge.f32.partialorder %v293, 0.0
      %vm326 = vcmp.ge.f32.partialorder %v294, 0.0
      %vm327 = vcmp.ge.f32.partialorder %v295, 0.0
      %vm328 = vcmp.ge.f32.partialorder %v296, 0.0
      %vm329 = vcmp.ge.f32.partialorder %v297, 0.0
      %vm330 = vcmp.ge.f32.partialorder %v298, 0.0
      %vm331 = vcmp.ge.f32.partialorder %v299, 0.0
      %vm332 = vcmp.ge.f32.partialorder %v300, 0.0
      %vm333 = vcmp.ge.f32.partialorder %v301, 0.0
      %vm334 = vcmp.ge.f32.partialorder %v302, 0.0
      %vm335 = vcmp.ge.f32.partialorder %v303, 0.0
      %vm336 = vcmp.ge.f32.partialorder %v304, 0.0
      %vm337 = vcmp.ge.f32.partialorder %v305, 0.0
      %vm338 = vcmp.ge.f32.partialorder %v306, 0.0
      %vm339 = vcmp.ge.f32.partialorder %v307, 0.0
      %vm340 = vcmp.ge.f32.partialorder %v308, 0.0
      %vm341 = vcmp.ge.f32.partialorder %v309, 0.0
      %vm342 = vcmp.ge.f32.partialorder %v310, 0.0
      %vm343 = vcmp.ge.f32.partialorder %v311, 0.0
      %vm344 = vcmp.ge.f32.partialorder %v312, 0.0
      %vm345 = vcmp.ge.f32.partialorder %v313, 0.0
      %v346 = vmul.f32 %v282, 0.2
      %v347 = vmul.f32 %v283, 0.2
      %v348 = vmul.f32 %v284, 0.2
      %v349 = vmul.f32 %v285, 0.2
      %v350 = vmul.f32 %v286, 0.2
      %v351 = vmul.f32 %v287, 0.2
      %v352 = vmul.f32 %v288, 0.2
      %v353 = vmul.f32 %v289, 0.2
      %v354 = vmul.f32 %v290, 0.2
      %v355 = vmul.f32 %v291, 0.2
      %v356 = vmul.f32 %v292, 0.2
      %v357 = vmul.f32 %v293, 0.2
      %v358 = vmul.f32 %v294, 0.2
      %v359 = vmul.f32 %v295, 0.2
      %v360 = vmul.f32 %v296, 0.2
      %v361 = vmul.f32 %v297, 0.2
      %v362 = vmul.f32 %v298, 0.2
      %v363 = vmul.f32 %v299, 0.2
      %v364 = vmul.f32 %v300, 0.2
      %v365 = vmul.f32 %v301, 0.2
      %v366 = vmul.f32 %v302, 0.2
      %v367 = vmul.f32 %v303, 0.2
      %v368 = vmul.f32 %v304, 0.2
      %v369 = vmul.f32 %v305, 0.2
      %v370 = vmul.f32 %v306, 0.2
      %v371 = vmul.f32 %v307, 0.2
      %v372 = vmul.f32 %v308, 0.2
      %v373 = vmul.f32 %v309, 0.2
      %v374 = vmul.f32 %v310, 0.2
      %v375 = vmul.f32 %v311, 0.2
      %v376 = vmul.f32 %v312, 0.2
      %v377 = vmul.f32 %v313, 0.2
      %v378 = vsel %vm314, %v282, %v346
      %v379 = vsel %vm315, %v283, %v347
      %v380 = vsel %vm316, %v284, %v348
      %v381 = vsel %vm317, %v285, %v349
      %v382 = vsel %vm318, %v286, %v350
      %v383 = vsel %vm319, %v287, %v351
      %v384 = vsel %vm320, %v288, %v352
      %v385 = vsel %vm321, %v289, %v353
      %v386 = vsel %vm322, %v290, %v354
      %v387 = vsel %vm323, %v291, %v355
      %v388 = vsel %vm324, %v292, %v356
      %v389 = vsel %vm325, %v293, %v357
      %v390 = vsel %vm326, %v294, %v358
      %v391 = vsel %vm327, %v295, %v359
      %v392 = vsel %vm328, %v296, %v360
      %v393 = vsel %vm329, %v297, %v361
      %v394 = vsel %vm330, %v298, %v362
      %v395 = vsel %vm331, %v299, %v363
      %v396 = vsel %vm332, %v300, %v364
      %v397 = vsel %vm333, %v301, %v365
      %v398 = vsel %vm334, %v302, %v366
      %v399 = vsel %vm335, %v303, %v367
      %v400 = vsel %vm336, %v304, %v368
      %v401 = vsel %vm337, %v305, %v369
      %v402 = vsel %vm338, %v306, %v370
      %v403 = vsel %vm339, %v307, %v371
      %v404 = vsel %vm340, %v308, %v372
      %v405 = vsel %vm341, %v309, %v373
      %v406 = vsel %vm342, %v310, %v374
      %v407 = vsel %vm343, %v311, %v375
      %v408 = vsel %vm344, %v312, %v376
      %v409 = vsel %vm345, %v313, %v377
      %410 = vst [vmem:[%s208] sm:$0xff] %v378
      %411 = vst [vmem:[%s208 + $0x8] sm:$0xff] %v379
      %412 = vst [vmem:[%s208 + $0x10] sm:$0xff] %v380
      %413 = vst [vmem:[%s208 + $0x18] sm:$0xff] %v381
      %414 = vst [vmem:[%s208 + $0x20] sm:$0xff] %v382
      %415 = vst [vmem:[%s208 + $0x28] sm:$0xff] %v383
      %416 = vst [vmem:[%s208 + $0x30] sm:$0xff] %v384
      %417 = vst [vmem:[%s208 + $0x38] sm:$0xff] %v385
      %418 = vst [vmem:[%s208 + $0x40] sm:$0xff] %v386
      %419 = vst [vmem:[%s208 + $0x48] sm:$0xff] %v387
      %420 = vst [vmem:[%s208 + $0x50] sm:$0xff] %v388
      %421 = vst [vmem:[%s208 + $0x58] sm:$0xff] %v389
      %422 = vst [vmem:[%s208 + $0x60] sm:$0xff] %v390
      %423 = vst [vmem:[%s208 + $0x68] sm:$0xff] %v391
      %424 = vst [vmem:[%s208 + $0x70] sm:$0xff] %v392
      %425 = vst [vmem:[%s208 + $0x78] sm:$0xff] %v393
      %426 = vst [vmem:[%s208 + $0x80] sm:$0xff] %v394
      %427 = vst [vmem:[%s208 + $0x88] sm:$0xff] %v395
      %428 = vst [vmem:[%s208 + $0x90] sm:$0xff] %v396
      %429 = vst [vmem:[%s208 + $0x98] sm:$0xff] %v397
      %430 = vst [vmem:[%s208 + $0xa0] sm:$0xff] %v398
      %431 = vst [vmem:[%s208 + $0xa8] sm:$0xff] %v399
      %432 = vst [vmem:[%s208 + $0xb0] sm:$0xff] %v400
      %433 = vst [vmem:[%s208 + $0xb8] sm:$0xff] %v401
      %434 = vst [vmem:[%s208 + $0xc0] sm:$0xff] %v402
      %435 = vst [vmem:[%s208 + $0xc8] sm:$0xff] %v403
      %436 = vst [vmem:[%s208 + $0xd0] sm:$0xff] %v404
      %437 = vst [vmem:[%s208 + $0xd8] sm:$0xff] %v405
      %438 = vst [vmem:[%s208 + $0xe0] sm:$0xff] %v406
      %439 = vst [vmem:[%s208 + $0xe8] sm:$0xff] %v407
      %440 = vst [vmem:[%s208 + $0xf0] sm:$0xff] %v408
      %441 = vst [vmem:[%s208 + $0xf8] sm:$0xff] %v409
      %s442 = smul.u32 32, %s19
      %p443 = scmp.lt.s32.totalorder %s18, 1
      %s444 = scalar_select %p443, %s18, 1
      %p445 = scmp.lt.s32.totalorder %s442, 31
      %s446 = scalar_select %p445, %s442, 31
      %s447 = smul.addr %s444, 32
      %s448 = sadd.s32 %s446, %s447
      %s449 = smul.addr %s448, 8
      %s450 = scalar_lea.vmem %s3, %s449
      // Predicated region
      $region33: #{_block_forward.3} parent=31 // pred_check
        %p451 = pneg %p116
      $region34: #{_block_forward.3} parent=31 // pred_check_branch
        %453 = sbr.rel (%p451) target = $region36
      $region35: #{_block_forward.3} parent=31 // pred_region
        %s454 = smul.u32 32, %s19
      $region36: #{_block_forward.3} parent=31 // pred_fallthru
        _
    $region32: #{_block_forward.3} parent=5 // pred_fallthru
      _
    %p455 = scmp.le.s32.totalorder 2, %s9
    // Predicated region
    $region37: #{_block_forward.3} parent=5 // pred_check
      %p456 = pneg %p455
    $region38: #{_block_forward.3} parent=5 // pred_check_branch
      %458 = sbr.rel (%p456) target = $region40
    $region39: #{_block_forward.3} parent=5 // pred_region
      %s459 = ssub.s32 %s9, 2
      // Predicated region
      $region41: #{_block_forward.3} parent=39 // pred_check
        %p460 = pneg %p122
      $region42: #{_block_forward.3} parent=39 // pred_check_branch
        %462 = sbr.rel (%p460) target = $region44
      $region43: #{_block_forward.3} parent=39 // pred_region
        %s463 = smul.u32 32, %s21
        %p464 = scmp.lt.s32.totalorder %s20, 1
        %s465 = scalar_select %p464, %s20, 1
        %p466 = scmp.lt.s32.totalorder %s463, 31
        %s467 = scalar_select %p466, %s463, 31
        %s468 = smul.addr %s465, 32
        %s469 = sadd.s32 %s467, %s468
        %s470 = smul.addr %s469, 8
        %s471 = scalar_lea.vmem %s3, %s470
      $region44: #{_block_forward.3} parent=39 // pred_fallthru
        _
    $region40: #{_block_forward.3} parent=5 // pred_fallthru
      _
  $region6: #{_block_forward.3} parent=0 // loop_footer
    %s13 = sadd.s32 1, %s9
  $region7: #{_block_forward.3} parent=0 // loop_footer_branch
    %8 = sbr.rel target = $region3
  $region8: #{_block_forward.3} parent=0 // loop_exit
    _

// kernel: _block_forward.2
$region0: #{_block_forward.2}
  #allocation0 [shape = 'u32[]', space=smem, size = 0x4, offset = 0x4, fixed_abs, tag = 'smem constant byte address 0x4 - core index']
  #allocation1 [shape = 'u32[72,128]{1,0:T(1,128)}', space=vmem, size = 0x9000, scoped, tag = 'internal scratch']
  %s0 = inlined_call_operand.vmem [shape: f32[2,256,36], index: 0, kind: input, shape index: {}]
  %s1 = inlined_call_operand.vmem [shape: f32[36,128], index: 1, kind: input, shape index: {}]
  %s2 = inlined_call_operand.vmem [shape: f32[2,256,128], index: 2, kind: output, shape index: {0}]
  %s3 = inlined_call_operand.vmem [shape: f32[2,1,8,128], index: 3, kind: output, shape index: {1}]
  %s4 = inlined_call_operand.vmem [shape: f32[2,1,8,128], index: 4, kind: output, shape index: {2}]
  %5 = xla_tuple %s2, %s3, %s4
  %s6 = sld [smem:[#allocation0]]
  $region57: #{_block_forward.2} parent=0
    _
  %s8 = ssub.s32 1, %s6
  %s9 = scalar_select 0, %s8, %s6
  loop: start=0, step=1, limit=4
  $region2: #{_block_forward.2} parent=0 // loop_pre_header
    _
  $region3: #{_block_forward.2} parent=0 // loop_header
    %s11 = sphi 0, %s15
    %p12 = scmp.ge.s32.totalorder %s11, 4
    %s18 = sphi 0, %s30
    %s19 = sphi 0, %s26
    %s20 = sphi 0, %s18
    %s21 = sphi 0, %s19
    %s22 = sphi 0, %s20
    %s23 = sphi 0, %s21
    %s35 = sphi 0, %s37
    %s38 = sphi 0, %s35
    %s39 = sphi 0, %s38
    %s55 = sphi 0, %s39
    %s59 = sphi 0, %s59
    %s61 = sphi 0, %s59
    %s62 = sphi 0, %s61
    %s76 = sphi 0, %s62
    %s84 = sphi 0, %s86
    %s87 = sphi 0, %s84
    %s88 = sphi 0, %s87
    %s104 = sphi 0, %s88
    %s112 = sphi 0, %s114
    %s115 = sphi 0, %s112
    %s116 = sphi 0, %s115
    %s132 = sphi 0, %s116
    %s140 = sphi 0, %s142
    %s143 = sphi 0, %s140
    %s144 = sphi 0, %s143
    %s160 = sphi 0, %s144
  $region4: #{_block_forward.2} parent=0 // loop_header_branch
    %14 = sbr.rel (%p12) target = $region8
  $region5: #{_block_forward.2} parent=0 // loop_body
    %s16 = ssub.s32 %s11, 1
    %s17 = ssub.s32 %s11, 2
    %s24 = sadd.s32 1, %s19
    %p25 = scmp.ge.s32.totalorder %s24, 1
    %s26 = scalar_select %p25, 0, %s24
    %s27 = sadd.s32 1, %s18
    %s28 = scalar_select %p25, %s27, %s18
    %p29 = scmp.ge.s32.totalorder %s28, 2
    %s30 = scalar_select %p29, 0, %s28
    %s31 = ssub.s32 %s18, %s30
    %s32 = ssub.s32 %s19, %s26
    %s33 = sor.u32 %s31, %s32
    %p34 = scmp.eq.s32.totalorder %s33, 0
    %s36 = sadd.s32 %s35, 1
    %s37 = scalar_select %p34, %s35, %s36
    %p40 = pneg %p34
    %p41 = scmp.eq.s32.totalorder %s11, 1
    %p42 = por %p40, %p41
    %p43 = scmp.ne.s32.totalorder %s35, %s38
    %p44 = scmp.eq.s32.totalorder %s11, 0
    %p45 = por %p43, %p44
    %p46 = scmp.ne.s32.totalorder %s35, %s38
    %p47 = scmp.eq.s32.totalorder %s16, 1
    %p48 = por %p46, %p47
    %p49 = scmp.ne.s32.totalorder %s38, %s39
    %p50 = scmp.eq.s32.totalorder %s16, 0
    %p51 = por %p49, %p50
    %p52 = scmp.ne.s32.totalorder %s38, %s39
    %p53 = scmp.eq.s32.totalorder %s17, 1
    %p54 = por %p52, %p53
    %p56 = scmp.ne.s32.totalorder %s39, %s55
    %p57 = scmp.eq.s32.totalorder %s17, 0
    %p58 = por %p56, %p57
    %s60 = sadd.s32 %s59, 1
    %p63 = scmp.eq.s32.totalorder %s11, 1
    %p64 = scmp.ne.s32.totalorder %s59, %s61
    %p65 = scmp.eq.s32.totalorder %s11, 0
    %p66 = por %p64, %p65
    %p67 = scmp.ne.s32.totalorder %s59, %s61
    %p68 = scmp.eq.s32.totalorder %s16, 1
    %p69 = por %p67, %p68
    %p70 = scmp.ne.s32.totalorder %s61, %s62
    %p71 = scmp.eq.s32.totalorder %s16, 0
    %p72 = por %p70, %p71
    %p73 = scmp.ne.s32.totalorder %s61, %s62
    %p74 = scmp.eq.s32.totalorder %s17, 1
    %p75 = por %p73, %p74
    %p77 = scmp.ne.s32.totalorder %s62, %s76
    %p78 = scmp.eq.s32.totalorder %s17, 0
    %p79 = por %p77, %p78
    %s80 = ssub.s32 %s18, %s30
    %s81 = ssub.s32 %s19, %s26
    %s82 = sor.u32 %s80, %s81
    %p83 = scmp.eq.s32.totalorder %s82, 0
    %s85 = sadd.s32 %s84, 1
    %s86 = scalar_select %p83, %s84, %s85
    %p89 = pneg %p83
    %p90 = scmp.eq.s32.totalorder %s11, 1
    %p91 = por %p89, %p90
    %p92 = scmp.ne.s32.totalorder %s84, %s87
    %p93 = scmp.eq.s32.totalorder %s11, 0
    %p94 = por %p92, %p93
    %p95 = scmp.ne.s32.totalorder %s84, %s87
    %p96 = scmp.eq.s32.totalorder %s16, 1
    %p97 = por %p95, %p96
    %p98 = scmp.ne.s32.totalorder %s87, %s88
    %p99 = scmp.eq.s32.totalorder %s16, 0
    %p100 = por %p98, %p99
    %p101 = scmp.ne.s32.totalorder %s87, %s88
    %p102 = scmp.eq.s32.totalorder %s17, 1
    %p103 = por %p101, %p102
    %p105 = scmp.ne.s32.totalorder %s88, %s104
    %p106 = scmp.eq.s32.totalorder %s17, 0
    %p107 = por %p105, %p106
    %s108 = ssub.s32 %s18, %s30
    %s109 = ssub.s32 %s19, %s26
    %s110 = sor.u32 %s108, %s109
    %p111 = scmp.eq.s32.totalorder %s110, 0
    %s113 = sadd.s32 %s112, 1
    %s114 = scalar_select %p111, %s112, %s113
    %p117 = pneg %p111
    %p118 = scmp.eq.s32.totalorder %s11, 1
    %p119 = por %p117, %p118
    %p120 = scmp.ne.s32.totalorder %s112, %s115
    %p121 = scmp.eq.s32.totalorder %s11, 0
    %p122 = por %p120, %p121
    %p123 = scmp.ne.s32.totalorder %s112, %s115
    %p124 = scmp.eq.s32.totalorder %s16, 1
    %p125 = por %p123, %p124
    %p126 = scmp.ne.s32.totalorder %s115, %s116
    %p127 = scmp.eq.s32.totalorder %s16, 0
    %p128 = por %p126, %p127
    %p129 = scmp.ne.s32.totalorder %s115, %s116
    %p130 = scmp.eq.s32.totalorder %s17, 1
    %p131 = por %p129, %p130
    %p133 = scmp.ne.s32.totalorder %s116, %s132
    %p134 = scmp.eq.s32.totalorder %s17, 0
    %p135 = por %p133, %p134
    %s136 = ssub.s32 %s18, %s30
    %s137 = ssub.s32 %s19, %s26
    %s138 = sor.u32 %s136, %s137
    %p139 = scmp.eq.s32.totalorder %s138, 0
    %s141 = sadd.s32 %s140, 1
    %s142 = scalar_select %p139, %s140, %s141
    %p145 = pneg %p139
    %p146 = scmp.eq.s32.totalorder %s11, 1
    %p147 = por %p145, %p146
    %p148 = scmp.ne.s32.totalorder %s140, %s143
    %p149 = scmp.eq.s32.totalorder %s11, 0
    %p150 = por %p148, %p149
    %p151 = scmp.ne.s32.totalorder %s140, %s143
    %p152 = scmp.eq.s32.totalorder %s16, 1
    %p153 = por %p151, %p152
    %p154 = scmp.ne.s32.totalorder %s143, %s144
    %p155 = scmp.eq.s32.totalorder %s16, 0
    %p156 = por %p154, %p155
    %p157 = scmp.ne.s32.totalorder %s143, %s144
    %p158 = scmp.eq.s32.totalorder %s17, 1
    %p159 = por %p157, %p158
    %p161 = scmp.ne.s32.totalorder %s144, %s160
    %p162 = scmp.eq.s32.totalorder %s17, 0
    %p163 = por %p161, %p162
    %p164 = scmp.le.s32.totalorder 1, %s11
    %p165 = scmp.lt.s32.totalorder %s11, 3
    %p166 = pnand %p164, %p165
    %p167 = pneg %p166
    // Predicated region
    $region9: #{_block_forward.2} parent=5 // pred_check
      _
    $region10: #{_block_forward.2} parent=5 // pred_check_branch
      %169 = sbr.rel (%p166) target = $region12
    $region11: #{_block_forward.2} parent=5 // pred_region
      %s170 = ssub.s32 %s11, 1
      // Predicated region
      $region13: #{_block_forward.2} parent=11 // pred_check
        %p171 = pneg %p72
      $region14: #{_block_forward.2} parent=11 // pred_check_branch
        %173 = sbr.rel (%p171) target = $region16
      $region15: #{_block_forward.2} parent=11 // pred_region
        _
      $region16: #{_block_forward.2} parent=11 // pred_fallthru
        _
    $region12: #{_block_forward.2} parent=5 // pred_fallthru
      _
    %p174 = scmp.lt.s32.totalorder %s11, 2
    // Predicated region
    $region17: #{_block_forward.2} parent=5 // pred_check
      %p175 = pneg %p174
    $region18: #{_block_forward.2} parent=5 // pred_check_branch
      %177 = sbr.rel (%p175) target = $region20
    $region19: #{_block_forward.2} parent=5 // pred_region
      // Predicated region
      $region21: #{_block_forward.2} parent=19 // pred_check
        %p178 = pneg %p45
      $region22: #{_block_forward.2} parent=19 // pred_check_branch
        %180 = sbr.rel (%p178) target = $region24
      $region23: #{_block_forward.2} parent=19 // pred_region
        %s181 = smul.u32 32, %s19
        %p182 = scmp.lt.s32.totalorder %s18, 1
        %s183 = scalar_select %p182, %s18, 1
        %p184 = scmp.lt.s32.totalorder %s181, 31
        %s185 = scalar_select %p184, %s181, 31
        %s186 = smul.addr %s183, 32
        %s187 = sadd.s32 %s185, %s186
        %s188 = smul.addr %s187, 8
        %s189 = scalar_lea.vmem %s0, %s188
        %s190 = smul.u32 32, %s19
      $region24: #{_block_forward.2} parent=19 // pred_fallthru
        _
    $region20: #{_block_forward.2} parent=5 // pred_fallthru
      _
    %p191 = scmp.le.s32.totalorder 1, %s11
    %p192 = scmp.lt.s32.totalorder %s11, 3
    %p193 = pnand %p191, %p192
    %p194 = pneg %p193
    // Predicated region
    $region25: #{_block_forward.2} parent=5 // pred_check
      _
    $region26: #{_block_forward.2} parent=5 // pred_check_branch
      %196 = sbr.rel (%p193) target = $region28
    $region27: #{_block_forward.2} parent=5 // pred_region
      %s197 = ssub.s32 %s11, 1
      %s198 = smul.u32 32, %s21
      %p199 = scmp.lt.s32.totalorder %s20, 1
      %s200 = scalar_select %p199, %s20, 1
      %p201 = scmp.lt.s32.totalorder %s198, 31
      %s202 = scalar_select %p201, %s198, 31
      %s203 = smul.addr %s200, 32
      %s204 = sadd.s32 %s202, %s203
      %s205 = smul.addr %s204, 8
      %s206 = scalar_lea.vmem %s0, %s205
      %p207 = pneg %p51
      %p208 = pneg %p48
      %p209 = pneg %p72
      %p210 = pneg %p69
      %p211 = pneg %p100
      %p212 = pneg %p97
      %s213 = smul.u32 32, %s21
      %p214 = scmp.lt.s32.totalorder %s20, 1
      %s215 = scalar_select %p214, %s20, 1
      %p216 = scmp.lt.s32.totalorder %s213, 31
      %s217 = scalar_select %p216, %s213, 31
      %s218 = smul.addr %s215, 32
      %s219 = sadd.s32 %s217, %s218
      %s220 = smul.addr %s219, 8
      %s221 = scalar_lea.vmem %s2, %s220
      %p222 = pneg %p128
      %p223 = pneg %p125
      %p224 = scmp.lt.s32.totalorder %s20, 1
      %s225 = scalar_select %p224, %s20, 1
      %p226 = scmp.lt.s32.totalorder %s21, 0
      %s227 = scalar_select %p226, %s21, 0
      %s228 = sadd.s32 %s227, %s225
      %s229 = smul.addr %s228, 8
      %s230 = scalar_lea.vmem %s3, %s229
      %p231 = pneg %p156
      %p232 = pneg %p153
      %p233 = scmp.lt.s32.totalorder %s20, 1
      %s234 = scalar_select %p233, %s20, 1
      %p235 = scmp.lt.s32.totalorder %s21, 0
      %s236 = scalar_select %p235, %s21, 0
      %s237 = sadd.s32 %s236, %s234
      %s238 = smul.addr %s237, 8
      %s239 = scalar_lea.vmem %s4, %s238
      %s240 = smul.u32 32, %s21
      %p241 = scmp.lt.s32.totalorder %s20, 1
      %s242 = scalar_select %p241, %s20, 1
      %p243 = scmp.lt.s32.totalorder %s240, 31
      %s244 = scalar_select %p243, %s240, 31
      %s245 = smul.addr %s242, 32
      %s246 = sadd.s32 %s244, %s245
      %s247 = smul.addr %s246, 8
      %s248 = scalar_lea.vmem %s0, %s247
      %s249 = smul.u32 32, %s21
      %s250 = smul.u32 32, %s21
      %p251 = scmp.lt.s32.totalorder %s20, 1
      %s252 = scalar_select %p251, %s20, 1
      %p253 = scmp.lt.s32.totalorder %s250, 31
      %s254 = scalar_select %p253, %s250, 31
      %s255 = smul.addr %s252, 32
      %s256 = sadd.s32 %s254, %s255
      %s257 = smul.addr %s256, 8
      %s258 = scalar_lea.vmem %s2, %s257
      %s259 = smul.u32 32, %s21
      %p260 = scmp.lt.s32.totalorder %s20, 1
      %s261 = scalar_select %p260, %s20, 1
      %p262 = scmp.lt.s32.totalorder %s21, 0
      %s263 = scalar_select %p262, %s21, 0
      %s264 = sadd.s32 %s263, %s261
      %s265 = smul.addr %s264, 8
      %s266 = scalar_lea.vmem %s3, %s265
      %p267 = scmp.lt.s32.totalorder %s20, 1
      %s268 = scalar_select %p267, %s20, 1
      %p269 = scmp.lt.s32.totalorder %s21, 0
      %s270 = scalar_select %p269, %s21, 0
      %s271 = sadd.s32 %s270, %s268
      %s272 = smul.addr %s271, 8
      %s273 = scalar_lea.vmem %s4, %s272
      %v274 = vld [vmem:[%s248] sm:$0xff]
      %v275 = vld [vmem:[%s248 + $0x8] sm:$0xff]
      %v276 = vld [vmem:[%s248 + $0x10] sm:$0xff]
      %v277 = vld [vmem:[%s248 + $0x18] sm:$0xff]
      %v278 = vld [vmem:[%s248 + $0x20] sm:$0xff]
      %v279 = vld [vmem:[%s248 + $0x28] sm:$0xff]
      %v280 = vld [vmem:[%s248 + $0x30] sm:$0xff]
      %v281 = vld [vmem:[%s248 + $0x38] sm:$0xff]
      %v282 = vld [vmem:[%s248 + $0x40] sm:$0xff]
      %v283 = vld [vmem:[%s248 + $0x48] sm:$0xff]
      %v284 = vld [vmem:[%s248 + $0x50] sm:$0xff]
      %v285 = vld [vmem:[%s248 + $0x58] sm:$0xff]
      %v286 = vld [vmem:[%s248 + $0x60] sm:$0xff]
      %v287 = vld [vmem:[%s248 + $0x68] sm:$0xff]
      %v288 = vld [vmem:[%s248 + $0x70] sm:$0xff]
      %v289 = vld [vmem:[%s248 + $0x78] sm:$0xff]
      %v290 = vld [vmem:[%s248 + $0x80] sm:$0xff]
      %v291 = vld [vmem:[%s248 + $0x88] sm:$0xff]
      %v292 = vld [vmem:[%s248 + $0x90] sm:$0xff]
      %v293 = vld [vmem:[%s248 + $0x98] sm:$0xff]
      %v294 = vld [vmem:[%s248 + $0xa0] sm:$0xff]
      %v295 = vld [vmem:[%s248 + $0xa8] sm:$0xff]
      %v296 = vld [vmem:[%s248 + $0xb0] sm:$0xff]
      %v297 = vld [vmem:[%s248 + $0xb8] sm:$0xff]
      %v298 = vld [vmem:[%s248 + $0xc0] sm:$0xff]
      %v299 = vld [vmem:[%s248 + $0xc8] sm:$0xff]
      %v300 = vld [vmem:[%s248 + $0xd0] sm:$0xff]
      %v301 = vld [vmem:[%s248 + $0xd8] sm:$0xff]
      %v302 = vld [vmem:[%s248 + $0xe0] sm:$0xff]
      %v303 = vld [vmem:[%s248 + $0xe8] sm:$0xff]
      %v304 = vld [vmem:[%s248 + $0xf0] sm:$0xff]
      %v305 = vld [vmem:[%s248 + $0xf8] sm:$0xff]
      %v306 = vld [vmem:[%s1] sm:$0xff]
      %v307 = vld [vmem:[%s1 + $0x8] sm:$0xff]
      %v308 = vld [vmem:[%s1 + $0x10] sm:$0xff]
      %v309 = vld [vmem:[%s1 + $0x18] sm:$0xff]
      %v310 = vld [vmem:[%s1 + $0x20] sm:$0xf]
      %vm311 = vcmask 293888
      %v313 = vsel %vm311, %v274, 0
      %v316 = vsel %vm311, %v275, 0
      %v319 = vsel %vm311, %v276, 0
      %v322 = vsel %vm311, %v277, 0
      %v325 = vsel %vm311, %v278, 0
      %v328 = vsel %vm311, %v279, 0
      %v331 = vsel %vm311, %v280, 0
      %v334 = vsel %vm311, %v281, 0
      %v337 = vsel %vm311, %v282, 0
      %v340 = vsel %vm311, %v283, 0
      %v343 = vsel %vm311, %v284, 0
      %v346 = vsel %vm311, %v285, 0
      %v349 = vsel %vm311, %v286, 0
      %v352 = vsel %vm311, %v287, 0
      %v355 = vsel %vm311, %v288, 0
      %v358 = vsel %vm311, %v289, 0
      %v361 = vsel %vm311, %v290, 0
      %v364 = vsel %vm311, %v291, 0
      %v367 = vsel %vm311, %v292, 0
      %v370 = vsel %vm311, %v293, 0
      %v373 = vsel %vm311, %v294, 0
      %v376 = vsel %vm311, %v295, 0
      %v379 = vsel %vm311, %v296, 0
      %v382 = vsel %vm311, %v297, 0
      %v385 = vsel %vm311, %v298, 0
      %v388 = vsel %vm311, %v299, 0
      %v391 = vsel %vm311, %v300, 0
      %v394 = vsel %vm311, %v301, 0
      %v397 = vsel %vm311, %v302, 0
      %v400 = vsel %vm311, %v303, 0
      %v403 = vsel %vm311, %v304, 0
      %v406 = vsel %vm311, %v305, 0
      %vm408 = vcmask 1043456
      %v410 = vsel %vm408, %v310, 0
      %412 = vmatpush.msra.mxu0 0.0
      %413 = vmatpush.msra.mxu0 0.0
      %414 = vmatpush.msra.mxu0 0.0
      %415 = vmatpush.msra.mxu0 0.0
      %416 = vmatpush.msra.mxu0 0.0
      %417 = vmatpush.msra.mxu0 0.0
      %418 = vmatpush.msra.mxu0 0.0
      %419 = vmatpush.msra.mxu0 0.0
      %420 = vmatpush.msra.mxu0 0.0
      %421 = vmatpush.msra.mxu0 0.0
      %422 = vmatpush.msra.mxu0 0.0
      %423 = vmatpush.msra.mxu0 %v410
      %424 = vmatpush.msra.mxu0 %v309
      %425 = vmatpush.msra.mxu0 %v308
      %426 = vmatpush.msra.mxu0 %v307
      %427 = vmatpush.msra.mxu0 %v306
      %428 = vmatmul.f32.gmra.mxu0 %v313
      %v429 = vpop.f32.mrf.mxu0
      %v430 = vadd.f32 0.0, %v429
      %431 = vmatmul.f32.gmra.mxu0 %v316
      %v432 = vpop.f32.mrf.mxu0
      %v433 = vadd.f32 0.0, %v432
      %434 = vmatmul.f32.gmra.mxu0 %v319
      %v435 = vpop.f32.mrf.mxu0
      %v436 = vadd.f32 0.0, %v435
      %437 = vmatmul.f32.gmra.mxu0 %v322
      %v438 = vpop.f32.mrf.mxu0
      %v439 = vadd.f32 0.0, %v438
      %440 = vmatmul.f32.gmra.mxu0 %v325
      %v441 = vpop.f32.mrf.mxu0
      %v442 = vadd.f32 0.0, %v441
      %443 = vmatmul.f32.gmra.mxu0 %v328
      %v444 = vpop.f32.mrf.mxu0
      %v445 = vadd.f32 0.0, %v444
      %446 = vmatmul.f32.gmra.mxu0 %v331
      %v447 = vpop.f32.mrf.mxu0
      %v448 = vadd.f32 0.0, %v447
      %449 = vmatmul.f32.gmra.mxu0 %v334
      %v450 = vpop.f32.mrf.mxu0
      %v451 = vadd.f32 0.0, %v450
      %452 = vmatmul.f32.gmra.mxu0 %v337
      %v453 = vpop.f32.mrf.mxu0
      %v454 = vadd.f32 0.0, %v453
      %455 = vmatmul.f32.gmra.mxu0 %v340
      %v456 = vpop.f32.mrf.mxu0
      %v457 = vadd.f32 0.0, %v456
      %458 = vmatmul.f32.gmra.mxu0 %v343
      %v459 = vpop.f32.mrf.mxu0
      %v460 = vadd.f32 0.0, %v459
      %461 = vmatmul.f32.gmra.mxu0 %v346
      %v462 = vpop.f32.mrf.mxu0
      %v463 = vadd.f32 0.0, %v462
      %464 = vmatmul.f32.gmra.mxu0 %v349
      %v465 = vpop.f32.mrf.mxu0
      %v466 = vadd.f32 0.0, %v465
      %467 = vmatmul.f32.gmra.mxu0 %v352
      %v468 = vpop.f32.mrf.mxu0
      %v469 = vadd.f32 0.0, %v468
      %470 = vmatmul.f32.gmra.mxu0 %v355
      %v471 = vpop.f32.mrf.mxu0
      %v472 = vadd.f32 0.0, %v471
      %473 = vmatmul.f32.gmra.mxu0 %v358
      %v474 = vpop.f32.mrf.mxu0
      %v475 = vadd.f32 0.0, %v474
      %476 = vmatmul.f32.gmra.mxu0 %v361
      %v477 = vpop.f32.mrf.mxu0
      %v478 = vadd.f32 0.0, %v477
      %479 = vmatmul.f32.gmra.mxu0 %v364
      %v480 = vpop.f32.mrf.mxu0
      %v481 = vadd.f32 0.0, %v480
      %482 = vmatmul.f32.gmra.mxu0 %v367
      %v483 = vpop.f32.mrf.mxu0
      %v484 = vadd.f32 0.0, %v483
      %485 = vmatmul.f32.gmra.mxu0 %v370
      %v486 = vpop.f32.mrf.mxu0
      %v487 = vadd.f32 0.0, %v486
      %488 = vmatmul.f32.gmra.mxu0 %v373
      %v489 = vpop.f32.mrf.mxu0
      %v490 = vadd.f32 0.0, %v489
      %491 = vmatmul.f32.gmra.mxu0 %v376
      %v492 = vpop.f32.mrf.mxu0
      %v493 = vadd.f32 0.0, %v492
      %494 = vmatmul.f32.gmra.mxu0 %v379
      %v495 = vpop.f32.mrf.mxu0
      %v496 = vadd.f32 0.0, %v495
      %497 = vmatmul.f32.gmra.mxu0 %v382
      %v498 = vpop.f32.mrf.mxu0
      %v499 = vadd.f32 0.0, %v498
      %500 = vmatmul.f32.gmra.mxu0 %v385
      %v501 = vpop.f32.mrf.mxu0
      %v502 = vadd.f32 0.0, %v501
      %503 = vmatmul.f32.gmra.mxu0 %v388
      %v504 = vpop.f32.mrf.mxu0
      %v505 = vadd.f32 0.0, %v504
      %506 = vmatmul.f32.gmra.mxu0 %v391
      %v507 = vpop.f32.mrf.mxu0
      %v508 = vadd.f32 0.0, %v507
      %509 = vmatmul.f32.gmra.mxu0 %v394
      %v510 = vpop.f32.mrf.mxu0
      %v511 = vadd.f32 0.0, %v510
      %512 = vmatmul.f32.gmra.mxu0 %v397
      %v513 = vpop.f32.mrf.mxu0
      %v514 = vadd.f32 0.0, %v513
      %515 = vmatmul.f32.gmra.mxu0 %v400
      %v516 = vpop.f32.mrf.mxu0
      %v517 = vadd.f32 0.0, %v516
      %518 = vmatmul.f32.gmra.mxu0 %v403
      %v519 = vpop.f32.mrf.mxu0
      %v520 = vadd.f32 0.0, %v519
      %521 = vmatmul.f32.gmra.mxu0 %v406
      %v522 = vpop.f32.mrf.mxu0
      %v523 = vadd.f32 0.0, %v522
      %524 = vdwg.mxu0
      %525 = vst [vmem:[%s258] sm:$0xff] %v430
      %526 = vst [vmem:[%s258 + $0x8] sm:$0xff] %v433
      %527 = vst [vmem:[%s258 + $0x10] sm:$0xff] %v436
      %528 = vst [vmem:[%s258 + $0x18] sm:$0xff] %v439
      %529 = vst [vmem:[%s258 + $0x20] sm:$0xff] %v442
      %530 = vst [vmem:[%s258 + $0x28] sm:$0xff] %v445
      %531 = vst [vmem:[%s258 + $0x30] sm:$0xff] %v448
      %532 = vst [vmem:[%s258 + $0x38] sm:$0xff] %v451
      %533 = vst [vmem:[%s258 + $0x40] sm:$0xff] %v454
      %534 = vst [vmem:[%s258 + $0x48] sm:$0xff] %v457
      %535 = vst [vmem:[%s258 + $0x50] sm:$0xff] %v460
      %536 = vst [vmem:[%s258 + $0x58] sm:$0xff] %v463
      %537 = vst [vmem:[%s258 + $0x60] sm:$0xff] %v466
      %538 = vst [vmem:[%s258 + $0x68] sm:$0xff] %v469
      %539 = vst [vmem:[%s258 + $0x70] sm:$0xff] %v472
      %540 = vst [vmem:[%s258 + $0x78] sm:$0xff] %v475
      %541 = vst [vmem:[%s258 + $0x80] sm:$0xff] %v478
      %542 = vst [vmem:[%s258 + $0x88] sm:$0xff] %v481
      %543 = vst [vmem:[%s258 + $0x90] sm:$0xff] %v484
      %544 = vst [vmem:[%s258 + $0x98] sm:$0xff] %v487
      %545 = vst [vmem:[%s258 + $0xa0] sm:$0xff] %v490
      %546 = vst [vmem:[%s258 + $0xa8] sm:$0xff] %v493
      %547 = vst [vmem:[%s258 + $0xb0] sm:$0xff] %v496
      %548 = vst [vmem:[%s258 + $0xb8] sm:$0xff] %v499
      %549 = vst [vmem:[%s258 + $0xc0] sm:$0xff] %v502
      %550 = vst [vmem:[%s258 + $0xc8] sm:$0xff] %v505
      %551 = vst [vmem:[%s258 + $0xd0] sm:$0xff] %v508
      %552 = vst [vmem:[%s258 + $0xd8] sm:$0xff] %v511
      %553 = vst [vmem:[%s258 + $0xe0] sm:$0xff] %v514
      %554 = vst [vmem:[%s258 + $0xe8] sm:$0xff] %v517
      %555 = vst [vmem:[%s258 + $0xf0] sm:$0xff] %v520
      %556 = vst [vmem:[%s258 + $0xf8] sm:$0xff] %v523
      %v557 = vadd.f32 %v430, %v433
      %v558 = vadd.f32 %v557, %v436
      %v559 = vadd.f32 %v558, %v439
      %v560 = vadd.f32 %v559, %v442
      %v561 = vadd.f32 %v560, %v445
      %v562 = vadd.f32 %v561, %v448
      %v563 = vadd.f32 %v562, %v451
      %v564 = vadd.f32 %v563, %v454
      %v565 = vadd.f32 %v564, %v457
      %v566 = vadd.f32 %v565, %v460
      %v567 = vadd.f32 %v566, %v463
      %v568 = vadd.f32 %v567, %v466
      %v569 = vadd.f32 %v568, %v469
      %v570 = vadd.f32 %v569, %v472
      %v571 = vadd.f32 %v570, %v475
      %v572 = vadd.f32 %v571, %v478
      %v573 = vadd.f32 %v572, %v481
      %v574 = vadd.f32 %v573, %v484
      %v575 = vadd.f32 %v574, %v487
      %v576 = vadd.f32 %v575, %v490
      %v577 = vadd.f32 %v576, %v493
      %v578 = vadd.f32 %v577, %v496
      %v579 = vadd.f32 %v578, %v499
      %v580 = vadd.f32 %v579, %v502
      %v581 = vadd.f32 %v580, %v505
      %v582 = vadd.f32 %v581, %v508
      %v583 = vadd.f32 %v582, %v511
      %v584 = vadd.f32 %v583, %v514
      %v585 = vadd.f32 %v584, %v517
      %v586 = vadd.f32 %v585, %v520
      %v587 = vadd.f32 %v586, %v523
      %v588 = vrot.slane %v587, 4
      %v589 = vadd.f32 %v587, %v588
      %v590 = vrot.slane %v589, 2
      %v591 = vadd.f32 %v589, %v590
      %v592 = vrot.slane %v591, 1
      %v593 = vadd.f32 %v591, %v592
      %v594 = vmul.f32 %v430, %v430
      %v595 = vmul.f32 %v433, %v433
      %v596 = vmul.f32 %v436, %v436
      %v597 = vmul.f32 %v439, %v439
      %v598 = vmul.f32 %v442, %v442
      %v599 = vmul.f32 %v445, %v445
      %v600 = vmul.f32 %v448, %v448
      %v601 = vmul.f32 %v451, %v451
      %v602 = vmul.f32 %v454, %v454
      %v603 = vmul.f32 %v457, %v457
      %v604 = vmul.f32 %v460, %v460
      %v605 = vmul.f32 %v463, %v463
      %v606 = vmul.f32 %v466, %v466
      %v607 = vmul.f32 %v469, %v469
      %v608 = vmul.f32 %v472, %v472
      %v609 = vmul.f32 %v475, %v475
      %v610 = vmul.f32 %v478, %v478
      %v611 = vmul.f32 %v481, %v481
      %v612 = vmul.f32 %v484, %v484
      %v613 = vmul.f32 %v487, %v487
      %v614 = vmul.f32 %v490, %v490
      %v615 = vmul.f32 %v493, %v493
      %v616 = vmul.f32 %v496, %v496
      %v617 = vmul.f32 %v499, %v499
      %v618 = vmul.f32 %v502, %v502
      %v619 = vmul.f32 %v505, %v505
      %v620 = vmul.f32 %v508, %v508
      %v621 = vmul.f32 %v511, %v511
      %v622 = vmul.f32 %v514, %v514
      %v623 = vmul.f32 %v517, %v517
      %v624 = vmul.f32 %v520, %v520
      %v625 = vmul.f32 %v523, %v523
      %v626 = vadd.f32 %v594, %v595
      %v627 = vadd.f32 %v626, %v596
      %v628 = vadd.f32 %v627, %v597
      %v629 = vadd.f32 %v628, %v598
      %v630 = vadd.f32 %v629, %v599
      %v631 = vadd.f32 %v630, %v600
      %v632 = vadd.f32 %v631, %v601
      %v633 = vadd.f32 %v632, %v602
      %v634 = vadd.f32 %v633, %v603
      %v635 = vadd.f32 %v634, %v604
      %v636 = vadd.f32 %v635, %v605
      %v637 = vadd.f32 %v636, %v606
      %v638 = vadd.f32 %v637, %v607
      %v639 = vadd.f32 %v638, %v608
      %v640 = vadd.f32 %v639, %v609
      %v641 = vadd.f32 %v640, %v610
      %v642 = vadd.f32 %v641, %v611
      %v643 = vadd.f32 %v642, %v612
      %v644 = vadd.f32 %v643, %v613
      %v645 = vadd.f32 %v644, %v614
      %v646 = vadd.f32 %v645, %v615
      %v647 = vadd.f32 %v646, %v616
      %v648 = vadd.f32 %v647, %v617
      %v649 = vadd.f32 %v648, %v618
      %v650 = vadd.f32 %v649, %v619
      %v651 = vadd.f32 %v650, %v620
      %v652 = vadd.f32 %v651, %v621
      %v653 = vadd.f32 %v652, %v622
      %v654 = vadd.f32 %v653, %v623
      %v655 = vadd.f32 %v654, %v624
      %v656 = vadd.f32 %v655, %v625
      %v657 = vrot.slane %v656, 4
      %v658 = vadd.f32 %v656, %v657
      %v659 = vrot.slane %v658, 2
      %v660 = vadd.f32 %v658, %v659
      %v661 = vrot.slane %v660, 1
      %v662 = vadd.f32 %v660, %v661
      %663 = vst [vmem:[%s266] sm:$0xff] %v593
      %664 = vst [vmem:[%s273] sm:$0xff] %v662
      %s665 = smul.u32 32, %s21
      %p666 = scmp.lt.s32.totalorder %s20, 1
      %s667 = scalar_select %p666, %s20, 1
      %p668 = scmp.lt.s32.totalorder %s665, 31
      %s669 = scalar_select %p668, %s665, 31
      %s670 = smul.addr %s667, 32
      %s671 = sadd.s32 %s669, %s670
      %s672 = smul.addr %s671, 8
      %s673 = scalar_lea.vmem %s2, %s672
      %p674 = scmp.lt.s32.totalorder %s20, 1
      %s675 = scalar_select %p674, %s20, 1
      %p676 = scmp.lt.s32.totalorder %s21, 0
      %s677 = scalar_select %p676, %s21, 0
      %s678 = sadd.s32 %s677, %s675
      %s679 = smul.addr %s678, 8
      %s680 = scalar_lea.vmem %s3, %s679
      %p681 = scmp.lt.s32.totalorder %s20, 1
      %s682 = scalar_select %p681, %s20, 1
      %p683 = scmp.lt.s32.totalorder %s21, 0
      %s684 = scalar_select %p683, %s21, 0
      %s685 = sadd.s32 %s684, %s682
      %s686 = smul.addr %s685, 8
      %s687 = scalar_lea.vmem %s4, %s686
      // Predicated region
      $region29: #{_block_forward.2} parent=27 // pred_check
        %p688 = pneg %p97
      $region30: #{_block_forward.2} parent=27 // pred_check_branch
        %690 = sbr.rel (%p688) target = $region32
      $region31: #{_block_forward.2} parent=27 // pred_region
        %s691 = smul.u32 32, %s21
      $region32: #{_block_forward.2} parent=27 // pred_fallthru
        _
      // Predicated region
      $region33: #{_block_forward.2} parent=27 // pred_check
        %p692 = pneg %p125
      $region34: #{_block_forward.2} parent=27 // pred_check_branch
        %694 = sbr.rel (%p692) target = $region36
      $region35: #{_block_forward.2} parent=27 // pred_region
        _
      $region36: #{_block_forward.2} parent=27 // pred_fallthru
        _
      // Predicated region
      $region37: #{_block_forward.2} parent=27 // pred_check
        %p695 = pneg %p153
      $region38: #{_block_forward.2} parent=27 // pred_check_branch
        %697 = sbr.rel (%p695) target = $region40
      $region39: #{_block_forward.2} parent=27 // pred_region
        _
      $region40: #{_block_forward.2} parent=27 // pred_fallthru
        _
    $region28: #{_block_forward.2} parent=5 // pred_fallthru
      _
    %p698 = scmp.le.s32.totalorder 2, %s11
    // Predicated region
    $region41: #{_block_forward.2} parent=5 // pred_check
      %p699 = pneg %p698
    $region42: #{_block_forward.2} parent=5 // pred_check_branch
      %701 = sbr.rel (%p699) target = $region44
    $region43: #{_block_forward.2} parent=5 // pred_region
      %s702 = ssub.s32 %s11, 2
      // Predicated region
      $region45: #{_block_forward.2} parent=43 // pred_check
        %p703 = pneg %p103
      $region46: #{_block_forward.2} parent=43 // pred_check_branch
        %705 = sbr.rel (%p703) target = $region48
      $region47: #{_block_forward.2} parent=43 // pred_region
        %s706 = smul.u32 32, %s23
        %p707 = scmp.lt.s32.totalorder %s22, 1
        %s708 = scalar_select %p707, %s22, 1
        %p709 = scmp.lt.s32.totalorder %s706, 31
        %s710 = scalar_select %p709, %s706, 31
        %s711 = smul.addr %s708, 32
        %s712 = sadd.s32 %s710, %s711
        %s713 = smul.addr %s712, 8
        %s714 = scalar_lea.vmem %s2, %s713
      $region48: #{_block_forward.2} parent=43 // pred_fallthru
        _
      // Predicated region
      $region49: #{_block_forward.2} parent=43 // pred_check
        %p715 = pneg %p131
      $region50: #{_block_forward.2} parent=43 // pred_check_branch
        %717 = sbr.rel (%p715) target = $region52
      $region51: #{_block_forward.2} parent=43 // pred_region
        %p718 = scmp.lt.s32.totalorder %s22, 1
        %s719 = scalar_select %p718, %s22, 1
        %p720 = scmp.lt.s32.totalorder %s23, 0
        %s721 = scalar_select %p720, %s23, 0
        %s722 = sadd.s32 %s721, %s719
        %s723 = smul.addr %s722, 8
        %s724 = scalar_lea.vmem %s3, %s723
      $region52: #{_block_forward.2} parent=43 // pred_fallthru
        _
      // Predicated region
      $region53: #{_block_forward.2} parent=43 // pred_check
        %p725 = pneg %p159
      $region54: #{_block_forward.2} parent=43 // pred_check_branch
        %727 = sbr.rel (%p725) target = $region56
      $region55: #{_block_forward.2} parent=43 // pred_region
        %p728 = scmp.lt.s32.totalorder %s22, 1
        %s729 = scalar_select %p728, %s22, 1
        %p730 = scmp.lt.s32.totalorder %s23, 0
        %s731 = scalar_select %p730, %s23, 0
        %s732 = sadd.s32 %s731, %s729
        %s733 = smul.addr %s732, 8
        %s734 = scalar_lea.vmem %s4, %s733
      $region56: #{_block_forward.2} parent=43 // pred_fallthru
        _
    $region44: #{_block_forward.2} parent=5 // pred_fallthru
      _
  $region6: #{_block_forward.2} parent=0 // loop_footer
    %s15 = sadd.s32 1, %s11
  $region7: #{_block_forward.2} parent=0 // loop_footer_branch
    %10 = sbr.rel target = $region3
  $region8: #{_block_forward.2} parent=0 // loop_exit
    _

</llo_original>
